<compile_context>
chip_gen: v5e
topology: v5e:2x2
jax: 0.10.0
libtpu: 0.0.40
codegen_flags: <defaults>
</compile_context>

<pallas_src>
import functools

import jax
import jax.numpy as jnp
from jax.experimental import pallas as pl
from jax.experimental.pallas import tpu as pltpu


def _round_up(x, m):
    return ((x + m - 1) // m) * m


def _device_kind():
    try:
        return jax.devices()[0].device_kind.lower()
    except Exception:
        return ""


def _odefunc_kernel(y_ref, w1_ref, b1_ref, w2_ref, b2_ref,
                    w3_ref, b3_ref, w4_ref, b4_ref, out_ref, *, act_dtype):
    """One row tile: 3x (matmul + bias + sigmoid) + final matmul + bias."""

    def layer(x_bf16, w_ref, b_ref):
        z = jnp.dot(x_bf16, w_ref[...], preferred_element_type=jnp.float32)
        z = z.astype(act_dtype) + b_ref[...].astype(act_dtype)
        # sigmoid(x) = 0.5*tanh(0.5*x) + 0.5 : a single EUP op per element.
        h = 0.5 * jnp.tanh(0.5 * z) + 0.5
        return h.astype(jnp.bfloat16)

    x = y_ref[...].astype(jnp.bfloat16)          # f32 -> bf16 cast inside kernel
    h = layer(x, w1_ref, b1_ref)
    h = layer(h, w2_ref, b2_ref)
    h = layer(h, w3_ref, b3_ref)

    # Last layer: weight/bias pre-padded with zero output columns up to a
    # multiple of 128 lanes -> concat([y_NN, zeros], -1) is free and the
    # output store is lane-dense (unmasked vst).
    out = jnp.dot(h, w4_ref[...], preferred_element_type=jnp.float32) + b4_ref[...]
    out_ref[...] = out.astype(out_ref.dtype)


def init_odefunc_params(key, N1, N2, hidden=200, dtype=jnp.float32):
    """Deterministic init matching nn.init.normal_(std=0.1), bias=0."""
    ks = jax.random.split(key, 4)
    dims = [(N1, hidden), (hidden, hidden), (hidden, hidden), (hidden, N2)]
    params = []
    for k, (din, dout) in zip(ks, dims):
        # PyTorch Linear stores weight as (out, in); we store transposed (in, out).
        w = (jax.random.normal(k, (dout, din), dtype=dtype) * 0.1).T
        b = jnp.zeros((1, dout), dtype=dtype)
        params.append((w, b))
    return params


def prepare_kernel_params(params, lane=128, hidden_pad=256):
    """One-time prep:
    - bf16 weights / f32 biases,
    - hidden dim padded to 256 (lane-dense activation tiles),
    - final layer padded to a lane-dense output width that also realizes the
      torch.cat([y_NN, zeros(...,4)], -1) zero-concat.
    Padded *input rows* of each following weight are zero, so sigmoid(0)=0.5
    on padded hidden lanes contributes nothing to the result."""
    (w1, b1), (w2, b2), (w3, b3), (w4, b4) = params
    hidden = w1.shape[1]
    hp = max(hidden_pad, _round_up(hidden, lane))
    N2 = w4.shape[1]
    n_out = N2 + 4                       # torch.cat adds 4 zero columns
    out_w = _round_up(n_out, lane)       # lane-dense output width

    def pad2(a, r, c):
        return jnp.pad(a, ((0, r - a.shape[0]), (0, c - a.shape[1])))

    w1p, b1p = pad2(w1, w1.shape[0], hp), pad2(b1, 1, hp)
    w2p, b2p = pad2(w2, hp, hp), pad2(b2, 1, hp)
    w3p, b3p = pad2(w3, hp, hp), pad2(b3, 1, hp)
    w4p, b4p = pad2(w4, hp, out_w), pad2(b4, 1, out_w)

    return {
        "weights": tuple(w.astype(jnp.bfloat16) for w in (w1p, w2p, w3p, w4p)),
        "biases": tuple(b.astype(jnp.float32) for b in (b1p, b2p, b3p, b4p)),
        "n_out": n_out,
    }


def odefunc_forward(t, y, kparams, *, row_tile=2048):
    """y: (M, K, N1) float32 -> (M, K, N2 + 4) float32.  `t` unused (as in PyTorch)."""
    del t
    M, K, N1 = y.shape
    w1, w2, w3, w4p = kparams["weights"]
    b1, b2, b3, b4p = kparams["biases"]
    n_out = kparams["n_out"]
    hp = w1.shape[1]
    out_w = w4p.shape[1]

    kind = _device_kind()
    # bf16 VPU/EUP exist on v6e and newer; keep f32 activations on v5e/older
    # (and if detection fails).
    bf16_act = bool(kind) and not any(g in kind for g in ("v2", "v3", "v4", "v5"))
    is_v7 = "v7" in kind
    act_dtype = jnp.bfloat16 if bf16_act else jnp.float32

    rows = M * K
    # Row tile: multiple of 8 sublanes; 2048 keeps per-step overhead <10% while
    # total VMEM stays at a few MiB on every generation.
    tr = min(row_tile, _round_up(rows, 8))
    rows_p = _round_up(rows, tr)
    grid = rows_p // tr
    if is_v7 and grid > 1 and grid % 2:
        grid += 1                       # even tile count -> both TCs balanced
        rows_p = grid * tr

    y2d = y.reshape(rows, N1)           # stays f32; cast to bf16 inside the kernel
    if rows_p != rows:
        y2d = jnp.pad(y2d, ((0, rows_p - rows), (0, 0)))

    # Weights/biases stay VMEM-resident across the row grid (constant index_map;
    # not re-DMA'd per step).  pl.Buffered(1) would shave ~0.25 MiB of VMEM but
    # is unnecessary at this footprint.
    resident = lambda a: pl.BlockSpec(a.shape, lambda i: (0, 0))

    flops = 2 * rows_p * (N1 * hp + 2 * hp * hp + hp * out_w)
    transcendentals = 3 * rows_p * hp
    bytes_accessed = (
        y2d.size * 4 + rows_p * out_w * 4
        + sum(int(w.size) * 2 for w in (w1, w2, w3, w4p))
        + sum(int(b.size) * 4 for b in (b1, b2, b3, b4p)))

    kernel = functools.partial(_odefunc_kernel, act_dtype=act_dtype)

    out2d = pl.pallas_call(
        kernel,
        out_shape=jax.ShapeDtypeStruct((rows_p, out_w), jnp.float32),
        grid_spec=pltpu.PrefetchScalarGridSpec(
            num_scalar_prefetch=0,
            grid=(grid,),
            in_specs=[
                pl.BlockSpec((tr, N1), lambda i: (i, 0)),
                resident(w1), resident(b1),
                resident(w2), resident(b2),
                resident(w3), resident(b3),
                resident(w4p), resident(b4p),
            ],
            out_specs=pl.BlockSpec((tr, out_w), lambda i: (i, 0)),
        ),
        compiler_params=pltpu.CompilerParams(
            dimension_semantics=(
                (pltpu.CORE_PARALLEL,) if is_v7 else ("parallel",)),
            vmem_limit_bytes=32 * 1024 * 1024,
        ),
        cost_estimate=pl.CostEstimate(
            flops=flops,
            transcendentals=transcendentals,
            bytes_accessed=bytes_accessed,
        ),
    )(y2d, w1, b1, w2, b2, w3, b3, w4p, b4p)

    # TODO(synk): a consumer that accepts the padded (rows_p, 128) layout could
    # take out2d directly and fuse this slice/reshape into its own op,
    # saving one HBM pass per RK stage.
    return out2d[:rows, :n_out].reshape(M, K, n_out)


def odefunc_reference(t, y, params):
    """Pure-JAX f32 reference of the PyTorch forward."""
    del t
    (w1, b1), (w2, b2), (w3, b3), (w4, b4) = params
    h = jax.nn.sigmoid(y @ w1 + b1[0])
    h = jax.nn.sigmoid(h @ w2 + b2[0])
    h = jax.nn.sigmoid(h @ w3 + b3[0])
    o = h @ w4 + b4[0]
    M, K, _ = y.shape
    return jnp.concatenate([o, jnp.zeros((M, K, 4), o.dtype)], axis=-1)


if __name__ == "__main__":
    key = jax.random.PRNGKey(0)
    k_param, k_y1, k_y2 = jax.random.split(key, 3)

    # Small shapes consistent with the forward: y is (M, K, N1).
    M, K, N1, N2 = 2, 8, 16, 12
    params = init_odefunc_params(k_param, N1, N2)
    kparams = prepare_kernel_params(params)   # one-time prep (hoisted out of forward)
    t = jnp.float32(0.0)                      # unused, matches PyTorch signature

    # Case 1: tiny demo shape (single grid step).
    y = jax.random.normal(k_y1, (M, K, N1), dtype=jnp.float32)
    out = jax.block_until_ready(odefunc_forward(t, y, kparams))
    ref = odefunc_reference(t, y, params)
    assert out.shape == (M, K, N2 + 4), out.shape
    assert jnp.allclose(out, ref, atol=2e-2, rtol=2e-2), \
        float(jnp.max(jnp.abs(out - ref)))
    assert jnp.all(out[..., N2:] == 0.0)

    # Case 2: more rows with a small explicit row_tile to exercise the
    # multi-tile grid + row-padding path (rows=1200 -> 5 tiles of 256).
    M2, K2 = 3, 400
    y2 = jax.random.normal(k_y2, (M2, K2, N1), dtype=jnp.float32)
    out2 = jax.block_until_ready(odefunc_forward(t, y2, kparams, row_tile=256))
    ref2 = odefunc_reference(t, y2, params)
    assert out2.shape == (M2, K2, N2 + 4), out2.shape
    assert jnp.allclose(out2, ref2, atol=2e-2, rtol=2e-2), \
        float(jnp.max(jnp.abs(out2 - ref2)))
    assert jnp.all(out2[..., N2:] == 0.0)

    print("KERNEL_OK")
</pallas_src>

<mosaic_0001>
module attributes {stable_mosaic.version = 11 : i64} {
  func.func @_odefunc_kernel(%arg0: i32, %arg1: memref<16x16xf32, #tpu.memory_space<vmem>>, %arg2: memref<16x256xbf16, #tpu.memory_space<vmem>>, %arg3: memref<1x256xf32, #tpu.memory_space<vmem>>, %arg4: memref<256x256xbf16, #tpu.memory_space<vmem>>, %arg5: memref<1x256xf32, #tpu.memory_space<vmem>>, %arg6: memref<256x256xbf16, #tpu.memory_space<vmem>>, %arg7: memref<1x256xf32, #tpu.memory_space<vmem>>, %arg8: memref<256x128xbf16, #tpu.memory_space<vmem>>, %arg9: memref<1x128xf32, #tpu.memory_space<vmem>>, %arg10: memref<16x128xf32, #tpu.memory_space<vmem>>) attributes {dimension_semantics = [#tpu.dimension_semantics<parallel>], iteration_bounds = array<i64: 1>, scalar_prefetch = 0 : i64, scratch_operands = 0 : i64, tpu.core_type = #tpu.core_type<tc>, window_params = [{transform_indices = @transform_0, window_bounds = array<i64: 16, 16>}, {pipeline_mode = #tpu.pipeline_mode<synchronous>, transform_indices = @transform_1, window_bounds = array<i64: 16, 256>}, {pipeline_mode = #tpu.pipeline_mode<synchronous>, transform_indices = @transform_2, window_bounds = array<i64: 1, 256>}, {pipeline_mode = #tpu.pipeline_mode<synchronous>, transform_indices = @transform_3, window_bounds = array<i64: 256, 256>}, {pipeline_mode = #tpu.pipeline_mode<synchronous>, transform_indices = @transform_4, window_bounds = array<i64: 1, 256>}, {pipeline_mode = #tpu.pipeline_mode<synchronous>, transform_indices = @transform_5, window_bounds = array<i64: 256, 256>}, {pipeline_mode = #tpu.pipeline_mode<synchronous>, transform_indices = @transform_6, window_bounds = array<i64: 1, 256>}, {pipeline_mode = #tpu.pipeline_mode<synchronous>, transform_indices = @transform_7, window_bounds = array<i64: 256, 128>}, {pipeline_mode = #tpu.pipeline_mode<synchronous>, transform_indices = @transform_8, window_bounds = array<i64: 1, 128>}, {transform_indices = @transform_9, window_bounds = array<i64: 16, 128>}]} {
    %c0 = arith.constant 0 : index
    %c0_0 = arith.constant 0 : index
    %0 = vector.load %arg1[%c0, %c0_0] : memref<16x16xf32, #tpu.memory_space<vmem>>, vector<16x16xf32>
    %1 = arith.truncf %0 : vector<16x16xf32> to vector<16x16xbf16>
    %c0_1 = arith.constant 0 : index
    %c0_2 = arith.constant 0 : index
    %2 = vector.load %arg2[%c0_1, %c0_2] : memref<16x256xbf16, #tpu.memory_space<vmem>>, vector<16x256xbf16>
    %cst = arith.constant dense<0.000000e+00> : vector<16x256xf32>
    %3 = tpu.matmul %1, %2, %cst {dimension_numbers = #tpu.dot_dimension_numbers<[1], [0], [0], [1], [0, 0, 1, 1], [], []>} : vector<16x16xbf16>, vector<16x256xbf16>, vector<16x256xf32> -> vector<16x256xf32>
    %4 = arith.truncf %3 : vector<16x256xf32> to vector<16x256xbf16>
    %c0_3 = arith.constant 0 : index
    %c0_4 = arith.constant 0 : index
    %5 = vector.load %arg3[%c0_3, %c0_4] : memref<1x256xf32, #tpu.memory_space<vmem>>, vector<1x256xf32>
    %6 = arith.truncf %5 : vector<1x256xf32> to vector<1x256xbf16>
    %7 = vector.broadcast %6 : vector<1x256xbf16> to vector<16x256xbf16>
    %8 = arith.addf %4, %7 : vector<16x256xbf16>
    %cst_5 = arith.constant 5.000000e-01 : bf16
    %9 = vector.broadcast %cst_5 : bf16 to vector<16x256xbf16>
    %10 = arith.mulf %9, %8 : vector<16x256xbf16>
    %11 = math.tanh %10 : vector<16x256xbf16>
    %cst_6 = arith.constant 5.000000e-01 : bf16
    %12 = vector.broadcast %cst_6 : bf16 to vector<16x256xbf16>
    %13 = arith.mulf %12, %11 : vector<16x256xbf16>
    %cst_7 = arith.constant 5.000000e-01 : bf16
    %14 = vector.broadcast %cst_7 : bf16 to vector<16x256xbf16>
    %15 = arith.addf %13, %14 : vector<16x256xbf16>
    %c0_8 = arith.constant 0 : index
    %c0_9 = arith.constant 0 : index
    %16 = vector.load %arg4[%c0_8, %c0_9] : memref<256x256xbf16, #tpu.memory_space<vmem>>, vector<256x256xbf16>
    %cst_10 = arith.constant dense<0.000000e+00> : vector<16x256xf32>
    %17 = tpu.matmul %15, %16, %cst_10 {dimension_numbers = #tpu.dot_dimension_numbers<[1], [0], [0], [1], [0, 0, 1, 1], [], []>} : vector<16x256xbf16>, vector<256x256xbf16>, vector<16x256xf32> -> vector<16x256xf32>
    %18 = arith.truncf %17 : vector<16x256xf32> to vector<16x256xbf16>
    %c0_11 = arith.constant 0 : index
    %c0_12 = arith.constant 0 : index
    %19 = vector.load %arg5[%c0_11, %c0_12] : memref<1x256xf32, #tpu.memory_space<vmem>>, vector<1x256xf32>
    %20 = arith.truncf %19 : vector<1x256xf32> to vector<1x256xbf16>
    %21 = vector.broadcast %20 : vector<1x256xbf16> to vector<16x256xbf16>
    %22 = arith.addf %18, %21 : vector<16x256xbf16>
    %cst_13 = arith.constant 5.000000e-01 : bf16
    %23 = vector.broadcast %cst_13 : bf16 to vector<16x256xbf16>
    %24 = arith.mulf %23, %22 : vector<16x256xbf16>
    %25 = math.tanh %24 : vector<16x256xbf16>
    %cst_14 = arith.constant 5.000000e-01 : bf16
    %26 = vector.broadcast %cst_14 : bf16 to vector<16x256xbf16>
    %27 = arith.mulf %26, %25 : vector<16x256xbf16>
    %cst_15 = arith.constant 5.000000e-01 : bf16
    %28 = vector.broadcast %cst_15 : bf16 to vector<16x256xbf16>
    %29 = arith.addf %27, %28 : vector<16x256xbf16>
    %c0_16 = arith.constant 0 : index
    %c0_17 = arith.constant 0 : index
    %30 = vector.load %arg6[%c0_16, %c0_17] : memref<256x256xbf16, #tpu.memory_space<vmem>>, vector<256x256xbf16>
    %cst_18 = arith.constant dense<0.000000e+00> : vector<16x256xf32>
    %31 = tpu.matmul %29, %30, %cst_18 {dimension_numbers = #tpu.dot_dimension_numbers<[1], [0], [0], [1], [0, 0, 1, 1], [], []>} : vector<16x256xbf16>, vector<256x256xbf16>, vector<16x256xf32> -> vector<16x256xf32>
    %32 = arith.truncf %31 : vector<16x256xf32> to vector<16x256xbf16>
    %c0_19 = arith.constant 0 : index
    %c0_20 = arith.constant 0 : index
    %33 = vector.load %arg7[%c0_19, %c0_20] : memref<1x256xf32, #tpu.memory_space<vmem>>, vector<1x256xf32>
    %34 = arith.truncf %33 : vector<1x256xf32> to vector<1x256xbf16>
    %35 = vector.broadcast %34 : vector<1x256xbf16> to vector<16x256xbf16>
    %36 = arith.addf %32, %35 : vector<16x256xbf16>
    %cst_21 = arith.constant 5.000000e-01 : bf16
    %37 = vector.broadcast %cst_21 : bf16 to vector<16x256xbf16>
    %38 = arith.mulf %37, %36 : vector<16x256xbf16>
    %39 = math.tanh %38 : vector<16x256xbf16>
    %cst_22 = arith.constant 5.000000e-01 : bf16
    %40 = vector.broadcast %cst_22 : bf16 to vector<16x256xbf16>
    %41 = arith.mulf %40, %39 : vector<16x256xbf16>
    %cst_23 = arith.constant 5.000000e-01 : bf16
    %42 = vector.broadcast %cst_23 : bf16 to vector<16x256xbf16>
    %43 = arith.addf %41, %42 : vector<16x256xbf16>
    %c0_24 = arith.constant 0 : index
    %c0_25 = arith.constant 0 : index
    %44 = vector.load %arg8[%c0_24, %c0_25] : memref<256x128xbf16, #tpu.memory_space<vmem>>, vector<256x128xbf16>
    %cst_26 = arith.constant dense<0.000000e+00> : vector<16x128xf32>
    %45 = tpu.matmul %43, %44, %cst_26 {dimension_numbers = #tpu.dot_dimension_numbers<[1], [0], [0], [1], [0, 0, 1, 1], [], []>} : vector<16x256xbf16>, vector<256x128xbf16>, vector<16x128xf32> -> vector<16x128xf32>
    %c0_27 = arith.constant 0 : index
    %c0_28 = arith.constant 0 : index
    %46 = vector.load %arg9[%c0_27, %c0_28] : memref<1x128xf32, #tpu.memory_space<vmem>>, vector<1x128xf32>
    %47 = vector.broadcast %46 : vector<1x128xf32> to vector<16x128xf32>
    %48 = arith.addf %45, %47 : vector<16x128xf32>
    %c0_29 = arith.constant 0 : index
    %c0_30 = arith.constant 0 : index
    %49 = vector.load %arg10[%c0_29, %c0_30] : memref<16x128xf32, #tpu.memory_space<vmem>>, vector<16x128xf32>
    tpu.vector_store %arg10[%c0_29, %c0_30], %48 {strides = array<i32>} : memref<16x128xf32, #tpu.memory_space<vmem>>, vector<16x128xf32>,
    return
  }
  func.func @transform_0(%arg0: i32) -> (i32, i32) {
    %c0_i32 = arith.constant 0 : i32
    %c0_i32_0 = arith.constant 0 : i32
    return %arg0, %c0_i32 : i32, i32
  }
  func.func @transform_1(%arg0: i32) -> (i32, i32) {
    %c0_i32 = arith.constant 0 : i32
    %c0_i32_0 = arith.constant 0 : i32
    %c0_i32_1 = arith.constant 0 : i32
    return %c0_i32, %c0_i32_0 : i32, i32
  }
  func.func @transform_2(%arg0: i32) -> (i32, i32) {
    %c0_i32 = arith.constant 0 : i32
    %c0_i32_0 = arith.constant 0 : i32
    %c0_i32_1 = arith.constant 0 : i32
    return %c0_i32, %c0_i32_0 : i32, i32
  }
  func.func @transform_3(%arg0: i32) -> (i32, i32) {
    %c0_i32 = arith.constant 0 : i32
    %c0_i32_0 = arith.constant 0 : i32
    %c0_i32_1 = arith.constant 0 : i32
    return %c0_i32, %c0_i32_0 : i32, i32
  }
  func.func @transform_4(%arg0: i32) -> (i32, i32) {
    %c0_i32 = arith.constant 0 : i32
    %c0_i32_0 = arith.constant 0 : i32
    %c0_i32_1 = arith.constant 0 : i32
    return %c0_i32, %c0_i32_0 : i32, i32
  }
  func.func @transform_5(%arg0: i32) -> (i32, i32) {
    %c0_i32 = arith.constant 0 : i32
    %c0_i32_0 = arith.constant 0 : i32
    %c0_i32_1 = arith.constant 0 : i32
    return %c0_i32, %c0_i32_0 : i32, i32
  }
  func.func @transform_6(%arg0: i32) -> (i32, i32) {
    %c0_i32 = arith.constant 0 : i32
    %c0_i32_0 = arith.constant 0 : i32
    %c0_i32_1 = arith.constant 0 : i32
    return %c0_i32, %c0_i32_0 : i32, i32
  }
  func.func @transform_7(%arg0: i32) -> (i32, i32) {
    %c0_i32 = arith.constant 0 : i32
    %c0_i32_0 = arith.constant 0 : i32
    %c0_i32_1 = arith.constant 0 : i32
    return %c0_i32, %c0_i32_0 : i32, i32
  }
  func.func @transform_8(%arg0: i32) -> (i32, i32) {
    %c0_i32 = arith.constant 0 : i32
    %c0_i32_0 = arith.constant 0 : i32
    %c0_i32_1 = arith.constant 0 : i32
    return %c0_i32, %c0_i32_0 : i32, i32
  }
  func.func @transform_9(%arg0: i32) -> (i32, i32) {
    %c0_i32 = arith.constant 0 : i32
    %c0_i32_0 = arith.constant 0 : i32
    return %arg0, %c0_i32 : i32, i32
  }
}

</mosaic_0001>

<llo_original>
// kernel: tpu_custom_call.1
$region0: #{tpu_custom_call.1}
  #allocation0 [shape = 'u32[]', space=smem, size = 0x4, offset = 0x4, fixed_abs, tag = 'smem constant byte address 0x4 - core index']
  #allocation1 [shape = 'u32[72,128]{1,0:T(1,128)}', space=vmem, size = 0x9000, scoped, tag = 'internal scratch']
  %s0 = inlined_call_operand.hbm [shape: f32[16,16], index: 0, kind: input, shape index: {}]
  %s1 = inlined_call_operand.hbm [shape: bf16[16,256], index: 1, kind: input, shape index: {}]
  %s2 = inlined_call_operand.hbm [shape: f32[1,256], index: 2, kind: input, shape index: {}]
  %s3 = inlined_call_operand.hbm [shape: bf16[256,256], index: 3, kind: input, shape index: {}]
  %s4 = inlined_call_operand.vmem [shape: f32[1,256], index: 4, kind: input, shape index: {}]
  %s5 = inlined_call_operand.hbm [shape: bf16[256,256], index: 5, kind: input, shape index: {}]
  %s6 = inlined_call_operand.vmem [shape: f32[1,256], index: 6, kind: input, shape index: {}]
  %s7 = inlined_call_operand.hbm [shape: bf16[256,128], index: 7, kind: input, shape index: {}]
  %s8 = inlined_call_operand.vmem [shape: f32[1,128], index: 8, kind: input, shape index: {}]
  %s9 = inlined_call_operand.hbm [shape: f32[16,128], index: 9, kind: output, shape index: {}]
  %s10 = sld [smem:[#allocation0]]
  $region70: #{tpu_custom_call.1} parent=0
    _
  %s12 = ssub.s32 1, %s10
  %s13 = scalar_select 0, %s12, %s10
  $region1: #{tpu_custom_call.1} parent=0
    #allocation2 [shape = 'u8[8192]{0}', space=vmem, size = 0x2000, scoped, tag = 'input window, operand 0, single buffered']
    #allocation3 [shape = 's32[1]{0}', space=sflag, size = 0x4, scoped, tag = 'scoped memory for tpu_custom_call.1']
    #allocation4 [shape = 's32[1]{0}', space=sflag, size = 0x4, scoped, tag = 'scoped memory for tpu_custom_call.1']
    #allocation5 [shape = 'u8[8192]{0}', space=vmem, size = 0x2000, scoped, tag = 'input window, operand 1, single buffered']
    #allocation6 [shape = 's32[1]{0}', space=sflag, size = 0x4, scoped, tag = 'scoped memory for tpu_custom_call.1']
    #allocation7 [shape = 'u8[1024]{0}', space=vmem, size = 0x400, scoped, tag = 'input window, operand 2, single buffered']
    #allocation8 [shape = 'u8[131072]{0}', space=vmem, size = 0x20000, scoped, tag = 'input window, operand 3, single buffered']
    #allocation9 [shape = 's32[1]{0}', space=sflag, size = 0x4, scoped, tag = 'scoped memory for tpu_custom_call.1']
    #allocation10 [shape = 'u8[131072]{0}', space=vmem, size = 0x20000, scoped, tag = 'input window, operand 5, single buffered']
    #allocation11 [shape = 'u8[65536]{0}', space=vmem, size = 0x10000, scoped, tag = 'input window, operand 7, single buffered']
    #allocation12 [shape = 's32[1]{0}', space=sflag, size = 0x4, scoped, tag = 'scoped memory for tpu_custom_call.1']
    #allocation13 [shape = 'u8[8192]{0}', space=vmem, size = 0x2000, scoped, tag = 'output window, operand 0, single buffered']
    %14 = vsyncpa [#allocation3], 0
    %15 = vsyncpa [#allocation6], 0
    %16 = vsyncpa [#allocation9], 0
    %17 = vsyncpa [#allocation12], 0
    %18 = vsyncpa [#allocation4], 0
    // Predicated region
    $region2: #{tpu_custom_call.1} parent=1 // pred_check
      _
    $region3: #{tpu_custom_call.1} parent=1 // pred_check_branch
      %20 = sbr.rel (0) target = $region5
    $region4: #{tpu_custom_call.1} parent=1 // pred_region
      %22 = vsyncadd [#allocation3], 0
      %s23 = sshll.u32 %s0, 4
      %s24 = int_to_ptr.hbm [resolvable:$true] %s23
      %s25 = sshll.u32 [#allocation2], 4
      %s26 = int_to_ptr.vmem [resolvable:$true] %s25
      %31 = dma.hbm_to_vmem [thread:$0]  %s24, 256, %s26, [#allocation3], 128, 128, 8
    $region5: #{tpu_custom_call.1} parent=1 // pred_fallthru
      _
    // Predicated region
    $region6: #{tpu_custom_call.1} parent=1 // pred_check
      _
    $region7: #{tpu_custom_call.1} parent=1 // pred_check_branch
      %33 = sbr.rel (0) target = $region9
    $region8: #{tpu_custom_call.1} parent=1 // pred_region
      %35 = vsyncadd [#allocation6], 0
      %s36 = sshll.u32 %s1, 4
      %s37 = int_to_ptr.hbm [resolvable:$true] %s36
      %s38 = sshll.u32 [#allocation5], 4
      %s39 = int_to_ptr.vmem [resolvable:$true] %s38
      %44 = dma.hbm_to_vmem [thread:$0]  %s37, 256, %s39, [#allocation6], 128, 128, 8
    $region9: #{tpu_custom_call.1} parent=1 // pred_fallthru
      _
    // Predicated region
    $region10: #{tpu_custom_call.1} parent=1 // pred_check
      _
    $region11: #{tpu_custom_call.1} parent=1 // pred_check_branch
      %46 = sbr.rel (0) target = $region13
    $region12: #{tpu_custom_call.1} parent=1 // pred_region
      %48 = vsyncadd [#allocation6], 0
      %s50 = sshll.u32 %s2, 4
      %s51 = int_to_ptr.hbm [resolvable:$true] %s50
      %s52 = sshll.u32 [#allocation7], 4
      %s53 = int_to_ptr.vmem [resolvable:$true] %s52
      %55 = dma.hbm_to_vmem [thread:$0]  %s51, 32, %s53, [#allocation6]
    $region13: #{tpu_custom_call.1} parent=1 // pred_fallthru
      _
    // Predicated region
    $region14: #{tpu_custom_call.1} parent=1 // pred_check
      _
    $region15: #{tpu_custom_call.1} parent=1 // pred_check_branch
      %57 = sbr.rel (0) target = $region17
    $region16: #{tpu_custom_call.1} parent=1 // pred_region
      %59 = vsyncadd [#allocation9], 0
      %s60 = sshll.u32 %s3, 4
      %s61 = int_to_ptr.hbm [resolvable:$true] %s60
      %s62 = sshll.u32 [#allocation8], 4
      %s63 = int_to_ptr.vmem [resolvable:$true] %s62
      %68 = dma.hbm_to_vmem [thread:$0]  %s61, 4096, %s63, [#allocation9], 128, 128, 8
    $region17: #{tpu_custom_call.1} parent=1 // pred_fallthru
      _
    // Predicated region
    $region18: #{tpu_custom_call.1} parent=1 // pred_check
      _
    $region19: #{tpu_custom_call.1} parent=1 // pred_check_branch
      %70 = sbr.rel (0) target = $region21
    $region20: #{tpu_custom_call.1} parent=1 // pred_region
      _
    $region21: #{tpu_custom_call.1} parent=1 // pred_fallthru
      _
    // Predicated region
    $region22: #{tpu_custom_call.1} parent=1 // pred_check
      _
    $region23: #{tpu_custom_call.1} parent=1 // pred_check_branch
      %72 = sbr.rel (0) target = $region25
    $region24: #{tpu_custom_call.1} parent=1 // pred_region
      %74 = vsyncadd [#allocation9], 0
      %s75 = sshll.u32 %s5, 4
      %s76 = int_to_ptr.hbm [resolvable:$true] %s75
      %s77 = sshll.u32 [#allocation10], 4
      %s78 = int_to_ptr.vmem [resolvable:$true] %s77
      %83 = dma.hbm_to_vmem [thread:$0]  %s76, 4096, %s78, [#allocation9], 128, 128, 8
    $region25: #{tpu_custom_call.1} parent=1 // pred_fallthru
      _
    // Predicated region
    $region26: #{tpu_custom_call.1} parent=1 // pred_check
      _
    $region27: #{tpu_custom_call.1} parent=1 // pred_check_branch
      %85 = sbr.rel (0) target = $region29
    $region28: #{tpu_custom_call.1} parent=1 // pred_region
      _
    $region29: #{tpu_custom_call.1} parent=1 // pred_fallthru
      _
    // Predicated region
    $region30: #{tpu_custom_call.1} parent=1 // pred_check
      _
    $region31: #{tpu_custom_call.1} parent=1 // pred_check_branch
      %87 = sbr.rel (0) target = $region33
    $region32: #{tpu_custom_call.1} parent=1 // pred_region
      %89 = vsyncadd [#allocation12], 0
      %s90 = sshll.u32 %s7, 4
      %s91 = int_to_ptr.hbm [resolvable:$true] %s90
      %s92 = sshll.u32 [#allocation11], 4
      %s93 = int_to_ptr.vmem [resolvable:$true] %s92
      %98 = dma.hbm_to_vmem [thread:$0]  %s91, 2048, %s93, [#allocation12], 64, 64, 4
    $region33: #{tpu_custom_call.1} parent=1 // pred_fallthru
      _
    // Predicated region
    $region34: #{tpu_custom_call.1} parent=1 // pred_check
      _
    $region35: #{tpu_custom_call.1} parent=1 // pred_check_branch
      %100 = sbr.rel (0) target = $region37
    $region36: #{tpu_custom_call.1} parent=1 // pred_region
      _
    $region37: #{tpu_custom_call.1} parent=1 // pred_fallthru
      _
    // Predicated region
    $region38: #{tpu_custom_call.1} parent=1 // pred_check
      _
    $region39: #{tpu_custom_call.1} parent=1 // pred_check_branch
      %102 = sbr.rel (0) target = $region41
    $region40: #{tpu_custom_call.1} parent=1 // pred_region
      %104 = dma.done [#allocation3], 256
    $region41: #{tpu_custom_call.1} parent=1 // pred_fallthru
      _
    // Predicated region
    $region42: #{tpu_custom_call.1} parent=1 // pred_check
      _
    $region43: #{tpu_custom_call.1} parent=1 // pred_check_branch
      %106 = sbr.rel (0) target = $region45
    $region44: #{tpu_custom_call.1} parent=1 // pred_region
      %108 = dma.done [#allocation6], 256
    $region45: #{tpu_custom_call.1} parent=1 // pred_fallthru
      _
    // Predicated region
    $region46: #{tpu_custom_call.1} parent=1 // pred_check
      _
    $region47: #{tpu_custom_call.1} parent=1 // pred_check_branch
      %110 = sbr.rel (0) target = $region49
    $region48: #{tpu_custom_call.1} parent=1 // pred_region
      %112 = dma.done [#allocation6], 32
    $region49: #{tpu_custom_call.1} parent=1 // pred_fallthru
      _
    // Predicated region
    $region50: #{tpu_custom_call.1} parent=1 // pred_check
      _
    $region51: #{tpu_custom_call.1} parent=1 // pred_check_branch
      %114 = sbr.rel (0) target = $region53
    $region52: #{tpu_custom_call.1} parent=1 // pred_region
      %116 = dma.done [#allocation9], 4096
    $region53: #{tpu_custom_call.1} parent=1 // pred_fallthru
      _
    // Predicated region
    $region54: #{tpu_custom_call.1} parent=1 // pred_check
      _
    $region55: #{tpu_custom_call.1} parent=1 // pred_check_branch
      %118 = sbr.rel (0) target = $region57
    $region56: #{tpu_custom_call.1} parent=1 // pred_region
      %120 = dma.done [#allocation9], 4096
    $region57: #{tpu_custom_call.1} parent=1 // pred_fallthru
      _
    // Predicated region
    $region58: #{tpu_custom_call.1} parent=1 // pred_check
      _
    $region59: #{tpu_custom_call.1} parent=1 // pred_check_branch
      %122 = sbr.rel (0) target = $region61
    $region60: #{tpu_custom_call.1} parent=1 // pred_region
      %124 = dma.done [#allocation12], 2048
    $region61: #{tpu_custom_call.1} parent=1 // pred_fallthru
      _
    %v126 = vld [vmem:[#allocation2] sm:$0xff]
    %v127 = vld [vmem:[#allocation2 + $0x8] sm:$0xff]
    %v128 = vpack.c.bf16 %v127, %v126
    %v129 = vld [vmem:[#allocation5] sm:$0xff]
    %v130 = vld [vmem:[#allocation5 + $0x8] sm:$0xff]
    %v133 = vunpack.c.l.b16 %v129
    %v134 = vunpack.c.h.b16 %v129
    %v135 = vunpack.c.l.b16 %v130
    %v136 = vunpack.c.h.b16 %v130
    %v137 = vpack.c.b16 %v135, %v133
    %v138 = vpack.c.b16 %v136, %v134
    %vm141 = vcmask 130048
    %v143 = vsel %vm141, %v128, 0
    %145 = vmatpush.bf16.msra.mxu0 0
    %146 = vmatpush.bf16.msra.mxu0 0
    %147 = vmatpush.bf16.msra.mxu0 0
    %148 = vmatpush.bf16.msra.mxu0 0
    %149 = vmatpush.bf16.msra.mxu0 0
    %150 = vmatpush.bf16.msra.mxu0 0
    %151 = vmatpush.bf16.msra.mxu0 0
    %152 = vmatpush.bf16.msra.mxu0 %v137
    %153 = vmatmul.bf16.gmra.mxu0 %v143
    %v154 = vpop.f32.mrf.mxu0
    %v155 = vadd.f32 0.0, %v154
    %v156 = vpop.f32.mrf.mxu0
    %v157 = vadd.f32 0.0, %v156
    %158 = vdwg.mxu0
    %159 = vmatpush.bf16.msra.mxu0 0
    %160 = vmatpush.bf16.msra.mxu0 0
    %161 = vmatpush.bf16.msra.mxu0 0
    %162 = vmatpush.bf16.msra.mxu0 0
    %163 = vmatpush.bf16.msra.mxu0 0
    %164 = vmatpush.bf16.msra.mxu0 0
    %165 = vmatpush.bf16.msra.mxu0 0
    %166 = vmatpush.bf16.msra.mxu0 %v138
    %167 = vmatmul.bf16.gmra.mxu0 %v143
    %v168 = vpop.f32.mrf.mxu0
    %v169 = vadd.f32 0.0, %v168
    %v170 = vpop.f32.mrf.mxu0
    %v171 = vadd.f32 0.0, %v170
    %172 = vdwg.mxu0
    %v173 = vpack.c.bf16 %v169, %v155
    %v174 = vpack.c.bf16 %v171, %v157
    %v175 = vld [vmem:[#allocation7] sm:$0x3]
    %v177 = vperm.slane %v175, 0
    %v178 = vperm.slane %v175, 1
    %v181 = vpack.c.bf16 %v178, %v177
    %v183 = vunpack.c.l.b16 %v181
    %v184 = vunpack.c.h.b16 %v181
    %v185 = vpack.c.b16 %v183, %v183
    %v186 = vpack.c.b16 %v184, %v184
    %v188 = vpack.i.b16 %v185, %v185
    %v190 = vperm.slane %v188, 0
    %v192 = vpack.i.b16 %v186, %v186
    %v194 = vperm.slane %v192, 0
    %v195 = vunpack.c.l.bf16 %v173
    %v196 = vunpack.c.h.bf16 %v173
    %v197 = vunpack.c.l.bf16 %v174
    %v198 = vunpack.c.h.bf16 %v174
    %v199 = vunpack.c.l.bf16 %v190
    %v200 = vunpack.c.l.bf16 %v194
    %v201 = vadd.f32 %v195, %v199
    %v202 = vadd.f32 %v196, %v200
    %v203 = vadd.f32 %v197, %v199
    %v204 = vadd.f32 %v198, %v200
    %v205 = vpack.c.bf16 %v202, %v201
    %v206 = vpack.c.bf16 %v204, %v203
    %v207 = vunpack.c.l.bf16 %v205
    %v208 = vunpack.c.h.bf16 %v205
    %v209 = vunpack.c.l.bf16 %v206
    %v210 = vunpack.c.h.bf16 %v206
    %v211 = vmul.f32 %v207, 0.5
    %v212 = vmul.f32 %v208, 0.5
    %v213 = vmul.f32 %v209, 0.5
    %v214 = vmul.f32 %v210, 0.5
    %v215 = vpack.c.bf16 %v212, %v211
    %v216 = vpack.c.bf16 %v214, %v213
    %v217 = vunpack.c.l.bf16 %v215
    %v218 = vunpack.c.h.bf16 %v215
    %v219 = vunpack.c.l.bf16 %v216
    %v220 = vunpack.c.h.bf16 %v216
    %v221 = vtanh.pop %v217
    %v222 = vtanh.pop %v218
    %v223 = vtanh.pop %v219
    %v224 = vtanh.pop %v220
    %v225 = vpack.c.bf16 %v222, %v221
    %v226 = vpack.c.bf16 %v224, %v223
    %v227 = vunpack.c.l.bf16 %v225
    %v228 = vunpack.c.h.bf16 %v225
    %v229 = vunpack.c.l.bf16 %v226
    %v230 = vunpack.c.h.bf16 %v226
    %v231 = vmul.f32 %v227, 0.5
    %v232 = vmul.f32 %v228, 0.5
    %v233 = vmul.f32 %v229, 0.5
    %v234 = vmul.f32 %v230, 0.5
    %v235 = vpack.c.bf16 %v232, %v231
    %v236 = vpack.c.bf16 %v234, %v233
    %v237 = vunpack.c.l.bf16 %v235
    %v238 = vunpack.c.h.bf16 %v235
    %v239 = vunpack.c.l.bf16 %v236
    %v240 = vunpack.c.h.bf16 %v236
    %v241 = vadd.f32 %v237, 0.5
    %v242 = vadd.f32 %v238, 0.5
    %v243 = vadd.f32 %v239, 0.5
    %v244 = vadd.f32 %v240, 0.5
    %v245 = vpack.c.bf16 %v243, %v241
    %v246 = vpack.c.bf16 %v244, %v242
    %v247 = vld [vmem:[#allocation8] sm:$0xff]
    %v248 = vld [vmem:[#allocation8 + $0x8] sm:$0xff]
    %v249 = vld [vmem:[#allocation8 + $0x10] sm:$0xff]
    %v250 = vld [vmem:[#allocation8 + $0x18] sm:$0xff]
    %v251 = vld [vmem:[#allocation8 + $0x20] sm:$0xff]
    %v252 = vld [vmem:[#allocation8 + $0x28] sm:$0xff]
    %v253 = vld [vmem:[#allocation8 + $0x30] sm:$0xff]
    %v254 = vld [vmem:[#allocation8 + $0x38] sm:$0xff]
    %v255 = vld [vmem:[#allocation8 + $0x40] sm:$0xff]
    %v256 = vld [vmem:[#allocation8 + $0x48] sm:$0xff]
    %v257 = vld [vmem:[#allocation8 + $0x50] sm:$0xff]
    %v258 = vld [vmem:[#allocation8 + $0x58] sm:$0xff]
    %v259 = vld [vmem:[#allocation8 + $0x60] sm:$0xff]
    %v260 = vld [vmem:[#allocation8 + $0x68] sm:$0xff]
    %v261 = vld [vmem:[#allocation8 + $0x70] sm:$0xff]
    %v262 = vld [vmem:[#allocation8 + $0x78] sm:$0xff]
    %v263 = vld [vmem:[#allocation8 + $0x80] sm:$0xff]
    %v264 = vld [vmem:[#allocation8 + $0x88] sm:$0xff]
    %v265 = vld [vmem:[#allocation8 + $0x90] sm:$0xff]
    %v266 = vld [vmem:[#allocation8 + $0x98] sm:$0xff]
    %v267 = vld [vmem:[#allocation8 + $0xa0] sm:$0xff]
    %v268 = vld [vmem:[#allocation8 + $0xa8] sm:$0xff]
    %v269 = vld [vmem:[#allocation8 + $0xb0] sm:$0xff]
    %v270 = vld [vmem:[#allocation8 + $0xb8] sm:$0xff]
    %v271 = vld [vmem:[#allocation8 + $0xc0] sm:$0xff]
    %v272 = vld [vmem:[#allocation8 + $0xc8] sm:$0xff]
    %v273 = vld [vmem:[#allocation8 + $0xd0] sm:$0xff]
    %v274 = vld [vmem:[#allocation8 + $0xd8] sm:$0xff]
    %v275 = vld [vmem:[#allocation8 + $0xe0] sm:$0xff]
    %v276 = vld [vmem:[#allocation8 + $0xe8] sm:$0xff]
    %v277 = vld [vmem:[#allocation8 + $0xf0] sm:$0xff]
    %v278 = vld [vmem:[#allocation8 + $0xf8] sm:$0xff]
    %v311 = vunpack.c.l.b16 %v247
    %v312 = vunpack.c.h.b16 %v247
    %v313 = vunpack.c.l.b16 %v248
    %v314 = vunpack.c.h.b16 %v248
    %v315 = vunpack.c.l.b16 %v249
    %v316 = vunpack.c.h.b16 %v249
    %v317 = vunpack.c.l.b16 %v250
    %v318 = vunpack.c.h.b16 %v250
    %v319 = vunpack.c.l.b16 %v251
    %v320 = vunpack.c.h.b16 %v251
    %v321 = vunpack.c.l.b16 %v252
    %v322 = vunpack.c.h.b16 %v252
    %v323 = vunpack.c.l.b16 %v253
    %v324 = vunpack.c.h.b16 %v253
    %v325 = vunpack.c.l.b16 %v254
    %v326 = vunpack.c.h.b16 %v254
    %v327 = vunpack.c.l.b16 %v255
    %v328 = vunpack.c.h.b16 %v255
    %v329 = vunpack.c.l.b16 %v256
    %v330 = vunpack.c.h.b16 %v256
    %v331 = vunpack.c.l.b16 %v257
    %v332 = vunpack.c.h.b16 %v257
    %v333 = vunpack.c.l.b16 %v258
    %v334 = vunpack.c.h.b16 %v258
    %v335 = vunpack.c.l.b16 %v259
    %v336 = vunpack.c.h.b16 %v259
    %v337 = vunpack.c.l.b16 %v260
    %v338 = vunpack.c.h.b16 %v260
    %v339 = vunpack.c.l.b16 %v261
    %v340 = vunpack.c.h.b16 %v261
    %v341 = vunpack.c.l.b16 %v262
    %v342 = vunpack.c.h.b16 %v262
    %v343 = vunpack.c.l.b16 %v263
    %v344 = vunpack.c.h.b16 %v263
    %v345 = vunpack.c.l.b16 %v264
    %v346 = vunpack.c.h.b16 %v264
    %v347 = vunpack.c.l.b16 %v265
    %v348 = vunpack.c.h.b16 %v265
    %v349 = vunpack.c.l.b16 %v266
    %v350 = vunpack.c.h.b16 %v266
    %v351 = vunpack.c.l.b16 %v267
    %v352 = vunpack.c.h.b16 %v267
    %v353 = vunpack.c.l.b16 %v268
    %v354 = vunpack.c.h.b16 %v268
    %v355 = vunpack.c.l.b16 %v269
    %v356 = vunpack.c.h.b16 %v269
    %v357 = vunpack.c.l.b16 %v270
    %v358 = vunpack.c.h.b16 %v270
    %v359 = vunpack.c.l.b16 %v271
    %v360 = vunpack.c.h.b16 %v271
    %v361 = vunpack.c.l.b16 %v272
    %v362 = vunpack.c.h.b16 %v272
    %v363 = vunpack.c.l.b16 %v273
    %v364 = vunpack.c.h.b16 %v273
    %v365 = vunpack.c.l.b16 %v274
    %v366 = vunpack.c.h.b16 %v274
    %v367 = vunpack.c.l.b16 %v275
    %v368 = vunpack.c.h.b16 %v275
    %v369 = vunpack.c.l.b16 %v276
    %v370 = vunpack.c.h.b16 %v276
    %v371 = vunpack.c.l.b16 %v277
    %v372 = vunpack.c.h.b16 %v277
    %v373 = vunpack.c.l.b16 %v278
    %v374 = vunpack.c.h.b16 %v278
    %v375 = vpack.c.b16 %v313, %v311
    %v376 = vpack.c.b16 %v314, %v312
    %v377 = vpack.c.b16 %v317, %v315
    %v378 = vpack.c.b16 %v318, %v316
    %v379 = vpack.c.b16 %v321, %v319
    %v380 = vpack.c.b16 %v322, %v320
    %v381 = vpack.c.b16 %v325, %v323
    %v382 = vpack.c.b16 %v326, %v324
    %v383 = vpack.c.b16 %v329, %v327
    %v384 = vpack.c.b16 %v330, %v328
    %v385 = vpack.c.b16 %v333, %v331
    %v386 = vpack.c.b16 %v334, %v332
    %v387 = vpack.c.b16 %v337, %v335
    %v388 = vpack.c.b16 %v338, %v336
    %v389 = vpack.c.b16 %v341, %v339
    %v390 = vpack.c.b16 %v342, %v340
    %v391 = vpack.c.b16 %v345, %v343
    %v392 = vpack.c.b16 %v346, %v344
    %v393 = vpack.c.b16 %v349, %v347
    %v394 = vpack.c.b16 %v350, %v348
    %v395 = vpack.c.b16 %v353, %v351
    %v396 = vpack.c.b16 %v354, %v352
    %v397 = vpack.c.b16 %v357, %v355
    %v398 = vpack.c.b16 %v358, %v356
    %v399 = vpack.c.b16 %v361, %v359
    %v400 = vpack.c.b16 %v362, %v360
    %v401 = vpack.c.b16 %v365, %v363
    %v402 = vpack.c.b16 %v366, %v364
    %v403 = vpack.c.b16 %v369, %v367
    %v404 = vpack.c.b16 %v370, %v368
    %v405 = vpack.c.b16 %v373, %v371
    %v406 = vpack.c.b16 %v374, %v372
    %439 = vmatpush.bf16.msra.mxu0 %v389
    %440 = vmatpush.bf16.msra.mxu0 %v387
    %441 = vmatpush.bf16.msra.mxu0 %v385
    %442 = vmatpush.bf16.msra.mxu0 %v383
    %443 = vmatpush.bf16.msra.mxu0 %v381
    %444 = vmatpush.bf16.msra.mxu0 %v379
    %445 = vmatpush.bf16.msra.mxu0 %v377
    %446 = vmatpush.bf16.msra.mxu0 %v375
    %447 = vmatmul.bf16.gmra.mxu0 %v245
    %v448 = vpop.f32.mrf.mxu0
    %v449 = vadd.f32 0.0, %v448
    %v450 = vpop.f32.mrf.mxu0
    %v451 = vadd.f32 0.0, %v450
    %452 = vdwg.mxu0
    %453 = vmatpush.bf16.msra.mxu0 %v405
    %454 = vmatpush.bf16.msra.mxu0 %v403
    %455 = vmatpush.bf16.msra.mxu0 %v401
    %456 = vmatpush.bf16.msra.mxu0 %v399
    %457 = vmatpush.bf16.msra.mxu0 %v397
    %458 = vmatpush.bf16.msra.mxu0 %v395
    %459 = vmatpush.bf16.msra.mxu0 %v393
    %460 = vmatpush.bf16.msra.mxu0 %v391
    %461 = vmatmul.bf16.gmra.mxu0 %v246
    %v462 = vpop.f32.mrf.mxu0
    %v463 = vadd.f32 %v449, %v462
    %v464 = vpop.f32.mrf.mxu0
    %v465 = vadd.f32 %v451, %v464
    %466 = vdwg.mxu0
    %467 = vmatpush.bf16.msra.mxu0 %v390
    %468 = vmatpush.bf16.msra.mxu0 %v388
    %469 = vmatpush.bf16.msra.mxu0 %v386
    %470 = vmatpush.bf16.msra.mxu0 %v384
    %471 = vmatpush.bf16.msra.mxu0 %v382
    %472 = vmatpush.bf16.msra.mxu0 %v380
    %473 = vmatpush.bf16.msra.mxu0 %v378
    %474 = vmatpush.bf16.msra.mxu0 %v376
    %475 = vmatmul.bf16.gmra.mxu0 %v245
    %v476 = vpop.f32.mrf.mxu0
    %v477 = vadd.f32 0.0, %v476
    %v478 = vpop.f32.mrf.mxu0
    %v479 = vadd.f32 0.0, %v478
    %480 = vdwg.mxu0
    %481 = vmatpush.bf16.msra.mxu0 %v406
    %482 = vmatpush.bf16.msra.mxu0 %v404
    %483 = vmatpush.bf16.msra.mxu0 %v402
    %484 = vmatpush.bf16.msra.mxu0 %v400
    %485 = vmatpush.bf16.msra.mxu0 %v398
    %486 = vmatpush.bf16.msra.mxu0 %v396
    %487 = vmatpush.bf16.msra.mxu0 %v394
    %488 = vmatpush.bf16.msra.mxu0 %v392
    %489 = vmatmul.bf16.gmra.mxu0 %v246
    %v490 = vpop.f32.mrf.mxu0
    %v491 = vadd.f32 %v477, %v490
    %v492 = vpop.f32.mrf.mxu0
    %v493 = vadd.f32 %v479, %v492
    %494 = vdwg.mxu0
    %v495 = vpack.c.bf16 %v491, %v463
    %v496 = vpack.c.bf16 %v493, %v465
    %v497 = vld [vmem:[%s4] sm:$0x3]
    %v499 = vperm.slane %v497, 0
    %v500 = vperm.slane %v497, 1
    %v503 = vpack.c.bf16 %v500, %v499
    %v505 = vunpack.c.l.b16 %v503
    %v506 = vunpack.c.h.b16 %v503
    %v507 = vpack.c.b16 %v505, %v505
    %v508 = vpack.c.b16 %v506, %v506
    %v510 = vpack.i.b16 %v507, %v507
    %v512 = vperm.slane %v510, 0
    %v514 = vpack.i.b16 %v508, %v508
    %v516 = vperm.slane %v514, 0
    %v517 = vunpack.c.l.bf16 %v495
    %v518 = vunpack.c.h.bf16 %v495
    %v519 = vunpack.c.l.bf16 %v496
    %v520 = vunpack.c.h.bf16 %v496
    %v521 = vunpack.c.l.bf16 %v512
    %v522 = vunpack.c.l.bf16 %v516
    %v523 = vadd.f32 %v517, %v521
    %v524 = vadd.f32 %v518, %v522
    %v525 = vadd.f32 %v519, %v521
    %v526 = vadd.f32 %v520, %v522
    %v527 = vpack.c.bf16 %v524, %v523
    %v528 = vpack.c.bf16 %v526, %v525
    %v529 = vunpack.c.l.bf16 %v527
    %v530 = vunpack.c.h.bf16 %v527
    %v531 = vunpack.c.l.bf16 %v528
    %v532 = vunpack.c.h.bf16 %v528
    %v533 = vmul.f32 %v529, 0.5
    %v534 = vmul.f32 %v530, 0.5
    %v535 = vmul.f32 %v531, 0.5
    %v536 = vmul.f32 %v532, 0.5
    %v537 = vpack.c.bf16 %v534, %v533
    %v538 = vpack.c.bf16 %v536, %v535
    %v539 = vunpack.c.l.bf16 %v537
    %v540 = vunpack.c.h.bf16 %v537
    %v541 = vunpack.c.l.bf16 %v538
    %v542 = vunpack.c.h.bf16 %v538
    %v543 = vtanh.pop %v539
    %v544 = vtanh.pop %v540
    %v545 = vtanh.pop %v541
    %v546 = vtanh.pop %v542
    %v547 = vpack.c.bf16 %v544, %v543
    %v548 = vpack.c.bf16 %v546, %v545
    %v549 = vunpack.c.l.bf16 %v547
    %v550 = vunpack.c.h.bf16 %v547
    %v551 = vunpack.c.l.bf16 %v548
    %v552 = vunpack.c.h.bf16 %v548
    %v553 = vmul.f32 %v549, 0.5
    %v554 = vmul.f32 %v550, 0.5
    %v555 = vmul.f32 %v551, 0.5
    %v556 = vmul.f32 %v552, 0.5
    %v557 = vpack.c.bf16 %v554, %v553
    %v558 = vpack.c.bf16 %v556, %v555
    %v559 = vunpack.c.l.bf16 %v557
    %v560 = vunpack.c.h.bf16 %v557
    %v561 = vunpack.c.l.bf16 %v558
    %v562 = vunpack.c.h.bf16 %v558
    %v563 = vadd.f32 %v559, 0.5
    %v564 = vadd.f32 %v560, 0.5
    %v565 = vadd.f32 %v561, 0.5
    %v566 = vadd.f32 %v562, 0.5
    %v567 = vpack.c.bf16 %v565, %v563
    %v568 = vpack.c.bf16 %v566, %v564
    %v569 = vld [vmem:[#allocation10] sm:$0xff]
    %v570 = vld [vmem:[#allocation10 + $0x8] sm:$0xff]
    %v571 = vld [vmem:[#allocation10 + $0x10] sm:$0xff]
    %v572 = vld [vmem:[#allocation10 + $0x18] sm:$0xff]
    %v573 = vld [vmem:[#allocation10 + $0x20] sm:$0xff]
    %v574 = vld [vmem:[#allocation10 + $0x28] sm:$0xff]
    %v575 = vld [vmem:[#allocation10 + $0x30] sm:$0xff]
    %v576 = vld [vmem:[#allocation10 + $0x38] sm:$0xff]
    %v577 = vld [vmem:[#allocation10 + $0x40] sm:$0xff]
    %v578 = vld [vmem:[#allocation10 + $0x48] sm:$0xff]
    %v579 = vld [vmem:[#allocation10 + $0x50] sm:$0xff]
    %v580 = vld [vmem:[#allocation10 + $0x58] sm:$0xff]
    %v581 = vld [vmem:[#allocation10 + $0x60] sm:$0xff]
    %v582 = vld [vmem:[#allocation10 + $0x68] sm:$0xff]
    %v583 = vld [vmem:[#allocation10 + $0x70] sm:$0xff]
    %v584 = vld [vmem:[#allocation10 + $0x78] sm:$0xff]
    %v585 = vld [vmem:[#allocation10 + $0x80] sm:$0xff]
    %v586 = vld [vmem:[#allocation10 + $0x88] sm:$0xff]
    %v587 = vld [vmem:[#allocation10 + $0x90] sm:$0xff]
    %v588 = vld [vmem:[#allocation10 + $0x98] sm:$0xff]
    %v589 = vld [vmem:[#allocation10 + $0xa0] sm:$0xff]
    %v590 = vld [vmem:[#allocation10 + $0xa8] sm:$0xff]
    %v591 = vld [vmem:[#allocation10 + $0xb0] sm:$0xff]
    %v592 = vld [vmem:[#allocation10 + $0xb8] sm:$0xff]
    %v593 = vld [vmem:[#allocation10 + $0xc0] sm:$0xff]
    %v594 = vld [vmem:[#allocation10 + $0xc8] sm:$0xff]
    %v595 = vld [vmem:[#allocation10 + $0xd0] sm:$0xff]
    %v596 = vld [vmem:[#allocation10 + $0xd8] sm:$0xff]
    %v597 = vld [vmem:[#allocation10 + $0xe0] sm:$0xff]
    %v598 = vld [vmem:[#allocation10 + $0xe8] sm:$0xff]
    %v599 = vld [vmem:[#allocation10 + $0xf0] sm:$0xff]
    %v600 = vld [vmem:[#allocation10 + $0xf8] sm:$0xff]
    %v633 = vunpack.c.l.b16 %v569
    %v634 = vunpack.c.h.b16 %v569
    %v635 = vunpack.c.l.b16 %v570
    %v636 = vunpack.c.h.b16 %v570
    %v637 = vunpack.c.l.b16 %v571
    %v638 = vunpack.c.h.b16 %v571
    %v639 = vunpack.c.l.b16 %v572
    %v640 = vunpack.c.h.b16 %v572
    %v641 = vunpack.c.l.b16 %v573
    %v642 = vunpack.c.h.b16 %v573
    %v643 = vunpack.c.l.b16 %v574
    %v644 = vunpack.c.h.b16 %v574
    %v645 = vunpack.c.l.b16 %v575
    %v646 = vunpack.c.h.b16 %v575
    %v647 = vunpack.c.l.b16 %v576
    %v648 = vunpack.c.h.b16 %v576
    %v649 = vunpack.c.l.b16 %v577
    %v650 = vunpack.c.h.b16 %v577
    %v651 = vunpack.c.l.b16 %v578
    %v652 = vunpack.c.h.b16 %v578
    %v653 = vunpack.c.l.b16 %v579
    %v654 = vunpack.c.h.b16 %v579
    %v655 = vunpack.c.l.b16 %v580
    %v656 = vunpack.c.h.b16 %v580
    %v657 = vunpack.c.l.b16 %v581
    %v658 = vunpack.c.h.b16 %v581
    %v659 = vunpack.c.l.b16 %v582
    %v660 = vunpack.c.h.b16 %v582
    %v661 = vunpack.c.l.b16 %v583
    %v662 = vunpack.c.h.b16 %v583
    %v663 = vunpack.c.l.b16 %v584
    %v664 = vunpack.c.h.b16 %v584
    %v665 = vunpack.c.l.b16 %v585
    %v666 = vunpack.c.h.b16 %v585
    %v667 = vunpack.c.l.b16 %v586
    %v668 = vunpack.c.h.b16 %v586
    %v669 = vunpack.c.l.b16 %v587
    %v670 = vunpack.c.h.b16 %v587
    %v671 = vunpack.c.l.b16 %v588
    %v672 = vunpack.c.h.b16 %v588
    %v673 = vunpack.c.l.b16 %v589
    %v674 = vunpack.c.h.b16 %v589
    %v675 = vunpack.c.l.b16 %v590
    %v676 = vunpack.c.h.b16 %v590
    %v677 = vunpack.c.l.b16 %v591
    %v678 = vunpack.c.h.b16 %v591
    %v679 = vunpack.c.l.b16 %v592
    %v680 = vunpack.c.h.b16 %v592
    %v681 = vunpack.c.l.b16 %v593
    %v682 = vunpack.c.h.b16 %v593
    %v683 = vunpack.c.l.b16 %v594
    %v684 = vunpack.c.h.b16 %v594
    %v685 = vunpack.c.l.b16 %v595
    %v686 = vunpack.c.h.b16 %v595
    %v687 = vunpack.c.l.b16 %v596
    %v688 = vunpack.c.h.b16 %v596
    %v689 = vunpack.c.l.b16 %v597
    %v690 = vunpack.c.h.b16 %v597
    %v691 = vunpack.c.l.b16 %v598
    %v692 = vunpack.c.h.b16 %v598
    %v693 = vunpack.c.l.b16 %v599
    %v694 = vunpack.c.h.b16 %v599
    %v695 = vunpack.c.l.b16 %v600
    %v696 = vunpack.c.h.b16 %v600
    %v697 = vpack.c.b16 %v635, %v633
    %v698 = vpack.c.b16 %v636, %v634
    %v699 = vpack.c.b16 %v639, %v637
    %v700 = vpack.c.b16 %v640, %v638
    %v701 = vpack.c.b16 %v643, %v641
    %v702 = vpack.c.b16 %v644, %v642
    %v703 = vpack.c.b16 %v647, %v645
    %v704 = vpack.c.b16 %v648, %v646
    %v705 = vpack.c.b16 %v651, %v649
    %v706 = vpack.c.b16 %v652, %v650
    %v707 = vpack.c.b16 %v655, %v653
    %v708 = vpack.c.b16 %v656, %v654
    %v709 = vpack.c.b16 %v659, %v657
    %v710 = vpack.c.b16 %v660, %v658
    %v711 = vpack.c.b16 %v663, %v661
    %v712 = vpack.c.b16 %v664, %v662
    %v713 = vpack.c.b16 %v667, %v665
    %v714 = vpack.c.b16 %v668, %v666
    %v715 = vpack.c.b16 %v671, %v669
    %v716 = vpack.c.b16 %v672, %v670
    %v717 = vpack.c.b16 %v675, %v673
    %v718 = vpack.c.b16 %v676, %v674
    %v719 = vpack.c.b16 %v679, %v677
    %v720 = vpack.c.b16 %v680, %v678
    %v721 = vpack.c.b16 %v683, %v681
    %v722 = vpack.c.b16 %v684, %v682
    %v723 = vpack.c.b16 %v687, %v685
    %v724 = vpack.c.b16 %v688, %v686
    %v725 = vpack.c.b16 %v691, %v689
    %v726 = vpack.c.b16 %v692, %v690
    %v727 = vpack.c.b16 %v695, %v693
    %v728 = vpack.c.b16 %v696, %v694
    %761 = vmatpush.bf16.msra.mxu0 %v711
    %762 = vmatpush.bf16.msra.mxu0 %v709
    %763 = vmatpush.bf16.msra.mxu0 %v707
    %764 = vmatpush.bf16.msra.mxu0 %v705
    %765 = vmatpush.bf16.msra.mxu0 %v703
    %766 = vmatpush.bf16.msra.mxu0 %v701
    %767 = vmatpush.bf16.msra.mxu0 %v699
    %768 = vmatpush.bf16.msra.mxu0 %v697
    %769 = vmatmul.bf16.gmra.mxu0 %v567
    %v770 = vpop.f32.mrf.mxu0
    %v771 = vadd.f32 0.0, %v770
    %v772 = vpop.f32.mrf.mxu0
    %v773 = vadd.f32 0.0, %v772
    %774 = vdwg.mxu0
    %775 = vmatpush.bf16.msra.mxu0 %v727
    %776 = vmatpush.bf16.msra.mxu0 %v725
    %777 = vmatpush.bf16.msra.mxu0 %v723
    %778 = vmatpush.bf16.msra.mxu0 %v721
    %779 = vmatpush.bf16.msra.mxu0 %v719
    %780 = vmatpush.bf16.msra.mxu0 %v717
    %781 = vmatpush.bf16.msra.mxu0 %v715
    %782 = vmatpush.bf16.msra.mxu0 %v713
    %783 = vmatmul.bf16.gmra.mxu0 %v568
    %v784 = vpop.f32.mrf.mxu0
    %v785 = vadd.f32 %v771, %v784
    %v786 = vpop.f32.mrf.mxu0
    %v787 = vadd.f32 %v773, %v786
    %788 = vdwg.mxu0
    %789 = vmatpush.bf16.msra.mxu0 %v712
    %790 = vmatpush.bf16.msra.mxu0 %v710
    %791 = vmatpush.bf16.msra.mxu0 %v708
    %792 = vmatpush.bf16.msra.mxu0 %v706
    %793 = vmatpush.bf16.msra.mxu0 %v704
    %794 = vmatpush.bf16.msra.mxu0 %v702
    %795 = vmatpush.bf16.msra.mxu0 %v700
    %796 = vmatpush.bf16.msra.mxu0 %v698
    %797 = vmatmul.bf16.gmra.mxu0 %v567
    %v798 = vpop.f32.mrf.mxu0
    %v799 = vadd.f32 0.0, %v798
    %v800 = vpop.f32.mrf.mxu0
    %v801 = vadd.f32 0.0, %v800
    %802 = vdwg.mxu0
    %803 = vmatpush.bf16.msra.mxu0 %v728
    %804 = vmatpush.bf16.msra.mxu0 %v726
    %805 = vmatpush.bf16.msra.mxu0 %v724
    %806 = vmatpush.bf16.msra.mxu0 %v722
    %807 = vmatpush.bf16.msra.mxu0 %v720
    %808 = vmatpush.bf16.msra.mxu0 %v718
    %809 = vmatpush.bf16.msra.mxu0 %v716
    %810 = vmatpush.bf16.msra.mxu0 %v714
    %811 = vmatmul.bf16.gmra.mxu0 %v568
    %v812 = vpop.f32.mrf.mxu0
    %v813 = vadd.f32 %v799, %v812
    %v814 = vpop.f32.mrf.mxu0
    %v815 = vadd.f32 %v801, %v814
    %816 = vdwg.mxu0
    %v817 = vpack.c.bf16 %v813, %v785
    %v818 = vpack.c.bf16 %v815, %v787
    %v819 = vld [vmem:[%s6] sm:$0x3]
    %v821 = vperm.slane %v819, 0
    %v822 = vperm.slane %v819, 1
    %v825 = vpack.c.bf16 %v822, %v821
    %v827 = vunpack.c.l.b16 %v825
    %v828 = vunpack.c.h.b16 %v825
    %v829 = vpack.c.b16 %v827, %v827
    %v830 = vpack.c.b16 %v828, %v828
    %v832 = vpack.i.b16 %v829, %v829
    %v834 = vperm.slane %v832, 0
    %v836 = vpack.i.b16 %v830, %v830
    %v838 = vperm.slane %v836, 0
    %v839 = vunpack.c.l.bf16 %v817
    %v840 = vunpack.c.h.bf16 %v817
    %v841 = vunpack.c.l.bf16 %v818
    %v842 = vunpack.c.h.bf16 %v818
    %v843 = vunpack.c.l.bf16 %v834
    %v844 = vunpack.c.l.bf16 %v838
    %v845 = vadd.f32 %v839, %v843
    %v846 = vadd.f32 %v840, %v844
    %v847 = vadd.f32 %v841, %v843
    %v848 = vadd.f32 %v842, %v844
    %v849 = vpack.c.bf16 %v846, %v845
    %v850 = vpack.c.bf16 %v848, %v847
    %v851 = vunpack.c.l.bf16 %v849
    %v852 = vunpack.c.h.bf16 %v849
    %v853 = vunpack.c.l.bf16 %v850
    %v854 = vunpack.c.h.bf16 %v850
    %v855 = vmul.f32 %v851, 0.5
    %v856 = vmul.f32 %v852, 0.5
    %v857 = vmul.f32 %v853, 0.5
    %v858 = vmul.f32 %v854, 0.5
    %v859 = vpack.c.bf16 %v856, %v855
    %v860 = vpack.c.bf16 %v858, %v857
    %v861 = vunpack.c.l.bf16 %v859
    %v862 = vunpack.c.h.bf16 %v859
    %v863 = vunpack.c.l.bf16 %v860
    %v864 = vunpack.c.h.bf16 %v860
    %v865 = vtanh.pop %v861
    %v866 = vtanh.pop %v862
    %v867 = vtanh.pop %v863
    %v868 = vtanh.pop %v864
    %v869 = vpack.c.bf16 %v866, %v865
    %v870 = vpack.c.bf16 %v868, %v867
    %v871 = vunpack.c.l.bf16 %v869
    %v872 = vunpack.c.h.bf16 %v869
    %v873 = vunpack.c.l.bf16 %v870
    %v874 = vunpack.c.h.bf16 %v870
    %v875 = vmul.f32 %v871, 0.5
    %v876 = vmul.f32 %v872, 0.5
    %v877 = vmul.f32 %v873, 0.5
    %v878 = vmul.f32 %v874, 0.5
    %v879 = vpack.c.bf16 %v876, %v875
    %v880 = vpack.c.bf16 %v878, %v877
    %v881 = vunpack.c.l.bf16 %v879
    %v882 = vunpack.c.h.bf16 %v879
    %v883 = vunpack.c.l.bf16 %v880
    %v884 = vunpack.c.h.bf16 %v880
    %v885 = vadd.f32 %v881, 0.5
    %v886 = vadd.f32 %v882, 0.5
    %v887 = vadd.f32 %v883, 0.5
    %v888 = vadd.f32 %v884, 0.5
    %v889 = vpack.c.bf16 %v887, %v885
    %v890 = vpack.c.bf16 %v888, %v886
    %v891 = vld [vmem:[#allocation11] sm:$0xf]
    %v892 = vld [vmem:[#allocation11 + $0x4] sm:$0xf]
    %v893 = vld [vmem:[#allocation11 + $0x8] sm:$0xf]
    %v894 = vld [vmem:[#allocation11 + $0xc] sm:$0xf]
    %v895 = vld [vmem:[#allocation11 + $0x10] sm:$0xf]
    %v896 = vld [vmem:[#allocation11 + $0x14] sm:$0xf]
    %v897 = vld [vmem:[#allocation11 + $0x18] sm:$0xf]
    %v898 = vld [vmem:[#allocation11 + $0x1c] sm:$0xf]
    %v899 = vld [vmem:[#allocation11 + $0x20] sm:$0xf]
    %v900 = vld [vmem:[#allocation11 + $0x24] sm:$0xf]
    %v901 = vld [vmem:[#allocation11 + $0x28] sm:$0xf]
    %v902 = vld [vmem:[#allocation11 + $0x2c] sm:$0xf]
    %v903 = vld [vmem:[#allocation11 + $0x30] sm:$0xf]
    %v904 = vld [vmem:[#allocation11 + $0x34] sm:$0xf]
    %v905 = vld [vmem:[#allocation11 + $0x38] sm:$0xf]
    %v906 = vld [vmem:[#allocation11 + $0x3c] sm:$0xf]
    %v907 = vld [vmem:[#allocation11 + $0x40] sm:$0xf]
    %v908 = vld [vmem:[#allocation11 + $0x44] sm:$0xf]
    %v909 = vld [vmem:[#allocation11 + $0x48] sm:$0xf]
    %v910 = vld [vmem:[#allocation11 + $0x4c] sm:$0xf]
    %v911 = vld [vmem:[#allocation11 + $0x50] sm:$0xf]
    %v912 = vld [vmem:[#allocation11 + $0x54] sm:$0xf]
    %v913 = vld [vmem:[#allocation11 + $0x58] sm:$0xf]
    %v914 = vld [vmem:[#allocation11 + $0x5c] sm:$0xf]
    %v915 = vld [vmem:[#allocation11 + $0x60] sm:$0xf]
    %v916 = vld [vmem:[#allocation11 + $0x64] sm:$0xf]
    %v917 = vld [vmem:[#allocation11 + $0x68] sm:$0xf]
    %v918 = vld [vmem:[#allocation11 + $0x6c] sm:$0xf]
    %v919 = vld [vmem:[#allocation11 + $0x70] sm:$0xf]
    %v920 = vld [vmem:[#allocation11 + $0x74] sm:$0xf]
    %v921 = vld [vmem:[#allocation11 + $0x78] sm:$0xf]
    %v922 = vld [vmem:[#allocation11 + $0x7c] sm:$0xf]
    %v923 = vld [vmem:[%s8] sm:$0x1]
    %v925 = vperm.slane %v923, 0
    %v959 = vunpack.c.l.b16 %v891
    %v960 = vunpack.c.l.b16 %v892
    %v961 = vunpack.c.l.b16 %v893
    %v962 = vunpack.c.l.b16 %v894
    %v963 = vunpack.c.l.b16 %v895
    %v964 = vunpack.c.l.b16 %v896
    %v965 = vunpack.c.l.b16 %v897
    %v966 = vunpack.c.l.b16 %v898
    %v967 = vunpack.c.l.b16 %v899
    %v968 = vunpack.c.l.b16 %v900
    %v969 = vunpack.c.l.b16 %v901
    %v970 = vunpack.c.l.b16 %v902
    %v971 = vunpack.c.l.b16 %v903
    %v972 = vunpack.c.l.b16 %v904
    %v973 = vunpack.c.l.b16 %v905
    %v974 = vunpack.c.l.b16 %v906
    %v975 = vunpack.c.l.b16 %v907
    %v976 = vunpack.c.l.b16 %v908
    %v977 = vunpack.c.l.b16 %v909
    %v978 = vunpack.c.l.b16 %v910
    %v979 = vunpack.c.l.b16 %v911
    %v980 = vunpack.c.l.b16 %v912
    %v981 = vunpack.c.l.b16 %v913
    %v982 = vunpack.c.l.b16 %v914
    %v983 = vunpack.c.l.b16 %v915
    %v984 = vunpack.c.l.b16 %v916
    %v985 = vunpack.c.l.b16 %v917
    %v986 = vunpack.c.l.b16 %v918
    %v987 = vunpack.c.l.b16 %v919
    %v988 = vunpack.c.l.b16 %v920
    %v989 = vunpack.c.l.b16 %v921
    %v990 = vunpack.c.l.b16 %v922
    %v991 = vpack.c.b16 %v960, %v959
    %v992 = vpack.c.b16 %v962, %v961
    %v993 = vpack.c.b16 %v964, %v963
    %v994 = vpack.c.b16 %v966, %v965
    %v995 = vpack.c.b16 %v968, %v967
    %v996 = vpack.c.b16 %v970, %v969
    %v997 = vpack.c.b16 %v972, %v971
    %v998 = vpack.c.b16 %v974, %v973
    %v999 = vpack.c.b16 %v976, %v975
    %v1000 = vpack.c.b16 %v978, %v977
    %v1001 = vpack.c.b16 %v980, %v979
    %v1002 = vpack.c.b16 %v982, %v981
    %v1003 = vpack.c.b16 %v984, %v983
    %v1004 = vpack.c.b16 %v986, %v985
    %v1005 = vpack.c.b16 %v988, %v987
    %v1006 = vpack.c.b16 %v990, %v989
    %1023 = vmatpush.bf16.msra.mxu0 %v998
    %1024 = vmatpush.bf16.msra.mxu0 %v997
    %1025 = vmatpush.bf16.msra.mxu0 %v996
    %1026 = vmatpush.bf16.msra.mxu0 %v995
    %1027 = vmatpush.bf16.msra.mxu0 %v994
    %1028 = vmatpush.bf16.msra.mxu0 %v993
    %1029 = vmatpush.bf16.msra.mxu0 %v992
    %1030 = vmatpush.bf16.msra.mxu0 %v991
    %1031 = vmatmul.bf16.gmra.mxu0 %v889
    %v1032 = vpop.f32.mrf.mxu0
    %v1033 = vadd.f32 %v925, %v1032
    %v1034 = vpop.f32.mrf.mxu0
    %v1035 = vadd.f32 %v925, %v1034
    %1036 = vdwg.mxu0
    %1037 = vmatpush.bf16.msra.mxu0 %v1006
    %1038 = vmatpush.bf16.msra.mxu0 %v1005
    %1039 = vmatpush.bf16.msra.mxu0 %v1004
    %1040 = vmatpush.bf16.msra.mxu0 %v1003
    %1041 = vmatpush.bf16.msra.mxu0 %v1002
    %1042 = vmatpush.bf16.msra.mxu0 %v1001
    %1043 = vmatpush.bf16.msra.mxu0 %v1000
    %1044 = vmatpush.bf16.msra.mxu0 %v999
    %1045 = vmatmul.bf16.gmra.mxu0 %v890
    %v1046 = vpop.f32.mrf.mxu0
    %v1047 = vadd.f32 %v1033, %v1046
    %v1048 = vpop.f32.mrf.mxu0
    %v1049 = vadd.f32 %v1035, %v1048
    %1050 = vdwg.mxu0
    %1051 = vst [vmem:[#allocation13] sm:$0xff] %v1047
    %1052 = vst [vmem:[#allocation13 + $0x8] sm:$0xff] %v1049
    // Predicated region
    $region62: #{tpu_custom_call.1} parent=1 // pred_check
      _
    $region63: #{tpu_custom_call.1} parent=1 // pred_check_branch
      %1054 = sbr.rel (0) target = $region65
    $region64: #{tpu_custom_call.1} parent=1 // pred_region
      %1056 = vsyncadd [#allocation4], 0
      %s1057 = sshll.u32 [#allocation13], 4
      %s1058 = int_to_ptr.vmem [resolvable:$true] %s1057
      %s1059 = sshll.u32 %s9, 4
      %s1060 = int_to_ptr.hbm [resolvable:$true] %s1059
      %1065 = dma.vmem_to_hbm [thread:$0]  %s1058, 256, %s1060, [#allocation4], 128, 128, 8
    $region65: #{tpu_custom_call.1} parent=1 // pred_fallthru
      _
    // Predicated region
    $region66: #{tpu_custom_call.1} parent=1 // pred_check
      _
    $region67: #{tpu_custom_call.1} parent=1 // pred_check_branch
      %1067 = sbr.rel (0) target = $region69
    $region68: #{tpu_custom_call.1} parent=1 // pred_region
      %1069 = dma.done [#allocation4], 256
    $region69: #{tpu_custom_call.1} parent=1 // pred_fallthru
      _
    %1070 = vsyncpa [#allocation3], 1
    %1071 = vsyncpa [#allocation6], 1
    %1072 = vsyncpa [#allocation9], 1
    %1073 = vsyncpa [#allocation12], 1
    %1074 = vsyncpa [#allocation4], 1

</llo_original>
